<compile_context>
chip_gen: v7x
topology: tpu7x:2x2x1
jax: 0.10.0
libtpu: 0.0.40
codegen_flags: <defaults>
</compile_context>

<pallas_src>
import functools

import jax
import jax.numpy as jnp
from jax.experimental import pallas as pl
from jax.experimental.pallas import tpu as pltpu

INPUT_SIZE = 784
HIDDEN1 = 78
HIDDEN2 = HIDDEN1 // 2          # 39
NUM_CLASSES = 10

H1_PAD = 128                    # lane-dense hidden width (78 -> 128)
H2_PAD = 128                    # lane-dense hidden width (39 -> 128)
CLS_PAD = 128                   # lane-dense class width  (10 -> 128)
NEG_INF = -1e30


def _mlp_logsoftmax_kernel(x_ref, w1_ref, b1_ref, w2_ref, b2_ref,
                           w3_ref, b3_ref, o_ref):
    # ---- layer 1: x cast to bf16 in VMEM, single-pass bf16 MXU, f32 accum ----
    x = x_ref[...].astype(jnp.bfloat16)
    h1 = jnp.dot(x, w1_ref[...],
                 preferred_element_type=jnp.float32) + b1_ref[...]
    h1 = jnp.maximum(h1, 0.0)                      # f32 elementwise (v5e-safe)

    # ---- layers 2/3: tiny VMEM-resident bf16 weights, bf16 activations -------
    h2 = jnp.dot(h1.astype(jnp.bfloat16), w2_ref[...],
                 preferred_element_type=jnp.float32) + b2_ref[...]
    h2 = jnp.maximum(h2, 0.0)
    logits = jnp.dot(h2.astype(jnp.bfloat16), w3_ref[...],
                     preferred_element_type=jnp.float32) + b3_ref[...]

    # ---- numerically stable log_softmax over the full 128-lane class axis ----
    # Padded class columns carry bias -1e30 -> exp(.) == 0, denominator exact.
    m = jnp.max(logits, axis=-1, keepdims=True)
    shifted = logits - m
    lse = jnp.log(jnp.sum(jnp.exp(shifted), axis=-1, keepdims=True))
    o_ref[...] = (shifted - lse).astype(o_ref.dtype)


def _round_up(n, m):
    return ((n + m - 1) // m) * m


@functools.partial(jax.jit, static_argnames=("block_batch",))
def logistic_regration_forward(x, params, *, block_batch=2048):
    """x: [batch, 784] float -> [batch, 10] float32 log-probabilities."""
    w1, b1, w2, b2, w3, b3 = params
    batch = x.shape[0]

    # Batch tile: multiple of 8 sublanes, capped at block_batch, and kept small
    # enough that the grid has >= 2 steps whenever possible (so the "parallel"
    # axis can shard across v7x's two TensorCores).  Ragged tail is handled by
    # Pallas: OOB input rows read garbage (rows are independent) and OOB output
    # writes are dropped, so no pre-padding of x is needed.
    tb = min(_round_up(block_batch, 8), _round_up(pl.cdiv(batch, 2), 8))
    grid = (pl.cdiv(batch, tb),)

    # Lane-dense padded parameters (tiny, ~300 KB total; fused into the jit and
    # VMEM-resident across grid steps via constant index_maps).
    w1p = jnp.zeros((INPUT_SIZE, H1_PAD), jnp.bfloat16).at[:, :HIDDEN1].set(
        w1.astype(jnp.bfloat16))
    b1p = jnp.zeros((1, H1_PAD), jnp.float32).at[:, :HIDDEN1].set(b1)
    w2p = jnp.zeros((H1_PAD, H2_PAD), jnp.bfloat16).at[:HIDDEN1, :HIDDEN2].set(
        w2.astype(jnp.bfloat16))
    b2p = jnp.zeros((1, H2_PAD), jnp.float32).at[:, :HIDDEN2].set(b2)
    w3p = jnp.zeros((H2_PAD, CLS_PAD), jnp.bfloat16).at[:HIDDEN2, :NUM_CLASSES].set(
        w3.astype(jnp.bfloat16))
    b3p = jnp.full((1, CLS_PAD), NEG_INF, jnp.float32).at[:, :NUM_CLASSES].set(b3)

    const = lambda shape: pl.BlockSpec(shape, lambda i: (0, 0))

    flops = 2 * batch * (INPUT_SIZE * H1_PAD + H1_PAD * H2_PAD + H2_PAD * CLS_PAD)
    bytes_accessed = (batch * INPUT_SIZE * x.dtype.itemsize   # x stream (native dtype)
                      + batch * CLS_PAD * 2                   # bf16 output
                      + (w1p.size + w2p.size + w3p.size) * 2
                      + (b1p.size + b2p.size + b3p.size) * 4)

    out = pl.pallas_call(
        _mlp_logsoftmax_kernel,
        out_shape=jax.ShapeDtypeStruct((batch, CLS_PAD), jnp.bfloat16),
        grid=grid,
        in_specs=[
            pl.BlockSpec((tb, INPUT_SIZE), lambda i: (i, 0)),   # x: tiled over batch
            const(w1p.shape), const(b1p.shape),                 # params: VMEM-resident
            const(w2p.shape), const(b2p.shape),
            const(w3p.shape), const(b3p.shape),
        ],
        out_specs=pl.BlockSpec((tb, CLS_PAD), lambda i: (i, 0)),
        compiler_params=pltpu.CompilerParams(
            dimension_semantics=("parallel",),          # megacore-shardable on v7x
            vmem_limit_bytes=48 * 1024 * 1024),
        cost_estimate=pl.CostEstimate(
            flops=int(flops),
            transcendentals=int(batch * (CLS_PAD + 1)),
            bytes_accessed=int(bytes_accessed)),
    )(x, w1p, b1p, w2p, b2p, w3p, b3p)

    # Slice off padded classes while still bf16, then upcast (fuses in the jit).
    return out[:, :NUM_CLASSES].astype(jnp.float32)


def init_params(key):
    """nn.Linear-style init (uniform +/- 1/sqrt(fan_in)); weights stored
    [in_features, out_features], biases [1, out_features]."""
    dims = [(INPUT_SIZE, HIDDEN1), (HIDDEN1, HIDDEN2), (HIDDEN2, NUM_CLASSES)]
    params = []
    for fan_in, fan_out in dims:
        key, kw, kb = jax.random.split(key, 3)
        bound = 1.0 / jnp.sqrt(float(fan_in))
        w = jax.random.uniform(kw, (fan_in, fan_out), jnp.float32, -bound, bound)
        b = jax.random.uniform(kb, (1, fan_out), jnp.float32, -bound, bound)
        params.extend([w, b])
    return tuple(params)


if __name__ == "__main__":
    key = jax.random.PRNGKey(0)
    key, kx = jax.random.split(key)

    batch = 2
    x = jax.random.normal(kx, (batch, INPUT_SIZE), jnp.float32)
    params = init_params(key)

    out = logistic_regration_forward(x, params)
    out = jax.block_until_ready(out)
    assert out.shape == (batch, NUM_CLASSES)
    assert out.dtype == jnp.float32

    w1, b1, w2, b2, w3, b3 = params

    # Mixed-precision reference mirroring the kernel (bf16 matmul operands,
    # f32 accumulation / elementwise); remaining delta is bf16 output storage
    # and MXU accumulation order.
    bf = lambda a: a.astype(jnp.bfloat16).astype(jnp.float32)
    h = jnp.maximum(bf(x) @ bf(w1) + b1, 0.0)
    h = jnp.maximum(bf(h) @ bf(w2) + b2, 0.0)
    ref_bf = jax.nn.log_softmax(bf(h) @ bf(w3) + b3, axis=-1)
    assert jnp.allclose(out, ref_bf, atol=2e-2, rtol=2e-2)

    # Full-f32 reference (looser tolerance covers the bf16 streaming).
    h32 = jnp.maximum(x @ w1 + b1, 0.0)
    h32 = jnp.maximum(h32 @ w2 + b2, 0.0)
    ref32 = jax.nn.log_softmax(h32 @ w3 + b3, axis=-1)
    assert jnp.allclose(out, ref32, atol=5e-2, rtol=5e-2)

    # Each row must be a valid log-probability distribution over 10 classes.
    assert jnp.allclose(jnp.sum(jnp.exp(out), axis=-1), 1.0, atol=2e-2)

    print("KERNEL_OK")
</pallas_src>

<mosaic_0001>
module attributes {stable_mosaic.version = 11 : i64} {
  func.func @_mlp_logsoftmax_kernel(%arg0: i32, %arg1: memref<8x784xf32, #tpu.memory_space<vmem>>, %arg2: memref<784x128xbf16, #tpu.memory_space<vmem>>, %arg3: memref<1x128xf32, #tpu.memory_space<vmem>>, %arg4: memref<128x128xbf16, #tpu.memory_space<vmem>>, %arg5: memref<1x128xf32, #tpu.memory_space<vmem>>, %arg6: memref<128x128xbf16, #tpu.memory_space<vmem>>, %arg7: memref<1x128xf32, #tpu.memory_space<vmem>>, %arg8: memref<8x128xbf16, #tpu.memory_space<vmem>>) attributes {dimension_semantics = [#tpu.dimension_semantics<parallel>], iteration_bounds = array<i64: 1>, scalar_prefetch = 0 : i64, scratch_operands = 0 : i64, tpu.core_type = #tpu.core_type<tc>, window_params = [{transform_indices = @transform_0, window_bounds = array<i64: 8, 784>}, {pipeline_mode = #tpu.pipeline_mode<synchronous>, transform_indices = @transform_1, window_bounds = array<i64: 784, 128>}, {pipeline_mode = #tpu.pipeline_mode<synchronous>, transform_indices = @transform_2, window_bounds = array<i64: 1, 128>}, {pipeline_mode = #tpu.pipeline_mode<synchronous>, transform_indices = @transform_3, window_bounds = array<i64: 128, 128>}, {pipeline_mode = #tpu.pipeline_mode<synchronous>, transform_indices = @transform_4, window_bounds = array<i64: 1, 128>}, {pipeline_mode = #tpu.pipeline_mode<synchronous>, transform_indices = @transform_5, window_bounds = array<i64: 128, 128>}, {pipeline_mode = #tpu.pipeline_mode<synchronous>, transform_indices = @transform_6, window_bounds = array<i64: 1, 128>}, {transform_indices = @transform_7, window_bounds = array<i64: 8, 128>}]} {
    %c0 = arith.constant 0 : index
    %c0_0 = arith.constant 0 : index
    %0 = vector.load %arg1[%c0, %c0_0] : memref<8x784xf32, #tpu.memory_space<vmem>>, vector<8x784xf32>
    %1 = arith.truncf %0 : vector<8x784xf32> to vector<8x784xbf16>
    %c0_1 = arith.constant 0 : index
    %c0_2 = arith.constant 0 : index
    %2 = vector.load %arg2[%c0_1, %c0_2] : memref<784x128xbf16, #tpu.memory_space<vmem>>, vector<784x128xbf16>
    %cst = arith.constant dense<0.000000e+00> : vector<8x128xf32>
    %3 = tpu.matmul %1, %2, %cst {dimension_numbers = #tpu.dot_dimension_numbers<[1], [0], [0], [1], [0, 0, 1, 1], [], []>} : vector<8x784xbf16>, vector<784x128xbf16>, vector<8x128xf32> -> vector<8x128xf32>
    %c0_3 = arith.constant 0 : index
    %c0_4 = arith.constant 0 : index
    %4 = vector.load %arg3[%c0_3, %c0_4] : memref<1x128xf32, #tpu.memory_space<vmem>>, vector<1x128xf32>
    %5 = vector.broadcast %4 : vector<1x128xf32> to vector<8x128xf32>
    %6 = arith.addf %3, %5 : vector<8x128xf32>
    %cst_5 = arith.constant 0.000000e+00 : f32
    %7 = vector.broadcast %cst_5 : f32 to vector<8x128xf32>
    %8 = arith.maximumf %6, %7 : vector<8x128xf32>
    %9 = arith.truncf %8 : vector<8x128xf32> to vector<8x128xbf16>
    %c0_6 = arith.constant 0 : index
    %c0_7 = arith.constant 0 : index
    %10 = vector.load %arg4[%c0_6, %c0_7] : memref<128x128xbf16, #tpu.memory_space<vmem>>, vector<128x128xbf16>
    %cst_8 = arith.constant dense<0.000000e+00> : vector<8x128xf32>
    %11 = tpu.matmul %9, %10, %cst_8 {dimension_numbers = #tpu.dot_dimension_numbers<[1], [0], [0], [1], [0, 0, 1, 1], [], []>} : vector<8x128xbf16>, vector<128x128xbf16>, vector<8x128xf32> -> vector<8x128xf32>
    %c0_9 = arith.constant 0 : index
    %c0_10 = arith.constant 0 : index
    %12 = vector.load %arg5[%c0_9, %c0_10] : memref<1x128xf32, #tpu.memory_space<vmem>>, vector<1x128xf32>
    %13 = vector.broadcast %12 : vector<1x128xf32> to vector<8x128xf32>
    %14 = arith.addf %11, %13 : vector<8x128xf32>
    %cst_11 = arith.constant 0.000000e+00 : f32
    %15 = vector.broadcast %cst_11 : f32 to vector<8x128xf32>
    %16 = arith.maximumf %14, %15 : vector<8x128xf32>
    %17 = arith.truncf %16 : vector<8x128xf32> to vector<8x128xbf16>
    %c0_12 = arith.constant 0 : index
    %c0_13 = arith.constant 0 : index
    %18 = vector.load %arg6[%c0_12, %c0_13] : memref<128x128xbf16, #tpu.memory_space<vmem>>, vector<128x128xbf16>
    %cst_14 = arith.constant dense<0.000000e+00> : vector<8x128xf32>
    %19 = tpu.matmul %17, %18, %cst_14 {dimension_numbers = #tpu.dot_dimension_numbers<[1], [0], [0], [1], [0, 0, 1, 1], [], []>} : vector<8x128xbf16>, vector<128x128xbf16>, vector<8x128xf32> -> vector<8x128xf32>
    %c0_15 = arith.constant 0 : index
    %c0_16 = arith.constant 0 : index
    %20 = vector.load %arg7[%c0_15, %c0_16] : memref<1x128xf32, #tpu.memory_space<vmem>>, vector<1x128xf32>
    %21 = vector.broadcast %20 : vector<1x128xf32> to vector<8x128xf32>
    %22 = arith.addf %19, %21 : vector<8x128xf32>
    %cst_17 = arith.constant dense<0xFF800000> : vector<8xf32>
    %23 = vector.multi_reduction <maximumf>, %22, %cst_17 [1] : vector<8x128xf32> to vector<8xf32>
    %24 = vector.shape_cast %23 : vector<8xf32> to vector<8x1xf32>
    %25 = vector.broadcast %24 : vector<8x1xf32> to vector<8x128xf32>
    %26 = arith.subf %22, %25 : vector<8x128xf32>
    %27 = math.exp %26 : vector<8x128xf32>
    %cst_18 = arith.constant dense<0.000000e+00> : vector<8xf32>
    %28 = vector.multi_reduction <add>, %27, %cst_18 [1] : vector<8x128xf32> to vector<8xf32>
    %29 = vector.shape_cast %28 : vector<8xf32> to vector<8x1xf32>
    %30 = math.log %29 : vector<8x1xf32>
    %31 = vector.broadcast %30 : vector<8x1xf32> to vector<8x128xf32>
    %32 = arith.subf %26, %31 : vector<8x128xf32>
    %33 = arith.truncf %32 : vector<8x128xf32> to vector<8x128xbf16>
    %c0_19 = arith.constant 0 : index
    %c0_20 = arith.constant 0 : index
    %34 = vector.load %arg8[%c0_19, %c0_20] : memref<8x128xbf16, #tpu.memory_space<vmem>>, vector<8x128xbf16>
    tpu.vector_store %arg8[%c0_19, %c0_20], %33 {strides = array<i32>} : memref<8x128xbf16, #tpu.memory_space<vmem>>, vector<8x128xbf16>,
    return
  }
  func.func @transform_0(%arg0: i32) -> (i32, i32) {
    %c0_i32 = arith.constant 0 : i32
    %c0_i32_0 = arith.constant 0 : i32
    return %arg0, %c0_i32 : i32, i32
  }
  func.func @transform_1(%arg0: i32) -> (i32, i32) {
    %c0_i32 = arith.constant 0 : i32
    %c0_i32_0 = arith.constant 0 : i32
    %c0_i32_1 = arith.constant 0 : i32
    return %c0_i32, %c0_i32_0 : i32, i32
  }
  func.func @transform_2(%arg0: i32) -> (i32, i32) {
    %c0_i32 = arith.constant 0 : i32
    %c0_i32_0 = arith.constant 0 : i32
    %c0_i32_1 = arith.constant 0 : i32
    return %c0_i32, %c0_i32_0 : i32, i32
  }
  func.func @transform_3(%arg0: i32) -> (i32, i32) {
    %c0_i32 = arith.constant 0 : i32
    %c0_i32_0 = arith.constant 0 : i32
    %c0_i32_1 = arith.constant 0 : i32
    return %c0_i32, %c0_i32_0 : i32, i32
  }
  func.func @transform_4(%arg0: i32) -> (i32, i32) {
    %c0_i32 = arith.constant 0 : i32
    %c0_i32_0 = arith.constant 0 : i32
    %c0_i32_1 = arith.constant 0 : i32
    return %c0_i32, %c0_i32_0 : i32, i32
  }
  func.func @transform_5(%arg0: i32) -> (i32, i32) {
    %c0_i32 = arith.constant 0 : i32
    %c0_i32_0 = arith.constant 0 : i32
    %c0_i32_1 = arith.constant 0 : i32
    return %c0_i32, %c0_i32_0 : i32, i32
  }
  func.func @transform_6(%arg0: i32) -> (i32, i32) {
    %c0_i32 = arith.constant 0 : i32
    %c0_i32_0 = arith.constant 0 : i32
    %c0_i32_1 = arith.constant 0 : i32
    return %c0_i32, %c0_i32_0 : i32, i32
  }
  func.func @transform_7(%arg0: i32) -> (i32, i32) {
    %c0_i32 = arith.constant 0 : i32
    %c0_i32_0 = arith.constant 0 : i32
    return %arg0, %c0_i32 : i32, i32
  }
}

</mosaic_0001>

<llo_original>
// kernel: logistic_regration_forward.1
$region0: #{logistic_regration_forward.1}
  #allocation0 [shape = 'u32[]', space=smem, size = 0x4, offset = 0x4, fixed_abs, tag = 'smem constant byte address 0x4 - core index']
  #allocation1 [shape = 'u32[144,128]{1,0:T(1,128)}', space=vmem, size = 0x12000, scoped, tag = 'internal scratch']
  %s0 = inlined_call_operand.vmem [shape: f32[2,784], index: 0, kind: input, shape index: {}]
  %s1 = inlined_call_operand.vmem [shape: bf16[784,128], index: 1, kind: input, shape index: {}]
  %s2 = inlined_call_operand.vmem [shape: f32[1,128], index: 2, kind: input, shape index: {}]
  %s3 = inlined_call_operand.vmem [shape: bf16[128,128], index: 3, kind: input, shape index: {}]
  %s4 = inlined_call_operand.vmem [shape: f32[1,128], index: 4, kind: input, shape index: {}]
  %s5 = inlined_call_operand.vmem [shape: bf16[128,128], index: 5, kind: input, shape index: {}]
  %s6 = inlined_call_operand.vmem [shape: f32[1,128], index: 6, kind: input, shape index: {}]
  %s7 = inlined_call_operand.vmem [shape: bf16[2,128], index: 7, kind: output, shape index: {}]
  %s8 = sld [smem:[#allocation0]]
  $region68: #{logistic_regration_forward.1} parent=0
    _
  %s10 = ssub.s32 1, %s8
  %s11 = scalar_select 0, %s10, %s8
  $region1: #{logistic_regration_forward.1} parent=0
    #allocation2 [shape = 'u8[2048]{0}', space=vmem, size = 0x800, scoped, tag = 'output window, operand 0, single buffered']
    // Predicated region
    $region2: #{logistic_regration_forward.1} parent=1 // pred_check
      _
    $region3: #{logistic_regration_forward.1} parent=1 // pred_check_branch
      %13 = sbr.rel (0) target = $region5
    $region4: #{logistic_regration_forward.1} parent=1 // pred_region
      _
    $region5: #{logistic_regration_forward.1} parent=1 // pred_fallthru
      _
    // Predicated region
    $region6: #{logistic_regration_forward.1} parent=1 // pred_check
      _
    $region7: #{logistic_regration_forward.1} parent=1 // pred_check_branch
      %15 = sbr.rel (0) target = $region9
    $region8: #{logistic_regration_forward.1} parent=1 // pred_region
      _
    $region9: #{logistic_regration_forward.1} parent=1 // pred_fallthru
      _
    // Predicated region
    $region10: #{logistic_regration_forward.1} parent=1 // pred_check
      _
    $region11: #{logistic_regration_forward.1} parent=1 // pred_check_branch
      %17 = sbr.rel (0) target = $region13
    $region12: #{logistic_regration_forward.1} parent=1 // pred_region
      _
    $region13: #{logistic_regration_forward.1} parent=1 // pred_fallthru
      _
    // Predicated region
    $region14: #{logistic_regration_forward.1} parent=1 // pred_check
      _
    $region15: #{logistic_regration_forward.1} parent=1 // pred_check_branch
      %19 = sbr.rel (0) target = $region17
    $region16: #{logistic_regration_forward.1} parent=1 // pred_region
      _
    $region17: #{logistic_regration_forward.1} parent=1 // pred_fallthru
      _
    // Predicated region
    $region18: #{logistic_regration_forward.1} parent=1 // pred_check
      _
    $region19: #{logistic_regration_forward.1} parent=1 // pred_check_branch
      %21 = sbr.rel (0) target = $region21
    $region20: #{logistic_regration_forward.1} parent=1 // pred_region
      _
    $region21: #{logistic_regration_forward.1} parent=1 // pred_fallthru
      _
    // Predicated region
    $region22: #{logistic_regration_forward.1} parent=1 // pred_check
      _
    $region23: #{logistic_regration_forward.1} parent=1 // pred_check_branch
      %23 = sbr.rel (0) target = $region25
    $region24: #{logistic_regration_forward.1} parent=1 // pred_region
      _
    $region25: #{logistic_regration_forward.1} parent=1 // pred_fallthru
      _
    // Predicated region
    $region26: #{logistic_regration_forward.1} parent=1 // pred_check
      _
    $region27: #{logistic_regration_forward.1} parent=1 // pred_check_branch
      %25 = sbr.rel (0) target = $region29
    $region28: #{logistic_regration_forward.1} parent=1 // pred_region
      _
    $region29: #{logistic_regration_forward.1} parent=1 // pred_fallthru
      _
    %v27 = vld [vmem:[%s0] sm:$0xff]
    %v28 = vld [vmem:[%s0 + $0x8] sm:$0x3f]
    %v29 = vld [vmem:[%s0 + $0xe] sm:$0xff]
    %v30 = vld [vmem:[%s0 + $0x16] sm:$0x3f]
    %v31 = vld [vmem:[%s0 + $0x1c] sm:$0xff]
    %v32 = vld [vmem:[%s0 + $0x24] sm:$0x3f]
    %v33 = vld [vmem:[%s0 + $0x2a] sm:$0xff]
    %v34 = vld [vmem:[%s0 + $0x32] sm:$0x3f]
    %v43 = vcombine.low %v27, %v29
    %v44 = vcombine.high %v27, %v29
    %v45 = vcombine.low %v31, %v33
    %v46 = vcombine.high %v31, %v33
    %v48 = vunpack.c.l.s4 1983009808
    %v49 = vunpack.c.0.s8 %v48
    %v50 = vlaneseq
    %v51 = vshrl.u32 %v50, 7
    %v52 = vsub.s32 %v49, %v51
    %v53 = vrot.slane %v43, %v52
    %v55 = vunpack.c.l.s4 1983009808
    %v56 = vunpack.c.0.s8 %v55
    %v57 = vlaneseq
    %v58 = vshrl.u32 %v57, 7
    %v59 = vsub.s32 %v56, %v58
    %v60 = vrot.slane %v44, %v59
    %v62 = vunpack.c.l.s4 1983009808
    %v63 = vunpack.c.0.s8 %v62
    %v64 = vlaneseq
    %v65 = vshrl.u32 %v64, 7
    %v66 = vsub.s32 %v63, %v65
    %v67 = vrot.slane %v45, %v66
    %v69 = vunpack.c.l.s4 1983009808
    %v70 = vunpack.c.0.s8 %v69
    %v71 = vlaneseq
    %v72 = vshrl.u32 %v71, 7
    %v73 = vsub.s32 %v70, %v72
    %v74 = vrot.slane %v46, %v73
    %v75 = vcombine.low %v53, %v67
    %v76 = vcombine.high %v53, %v67
    %v77 = vcombine.low %v60, %v74
    %v78 = vcombine.high %v60, %v74
    %v79 = vcombine.low %v28, %v30
    %v80 = vcombine.high %v28, %v30
    %v81 = vcombine.low %v32, %v34
    %v82 = vcombine.high %v32, %v34
    %v84 = vunpack.c.l.s4 1983009808
    %v85 = vunpack.c.0.s8 %v84
    %v86 = vlaneseq
    %v87 = vshrl.u32 %v86, 7
    %v88 = vsub.s32 %v85, %v87
    %v89 = vrot.slane %v79, %v88
    %v91 = vunpack.c.l.s4 1983009808
    %v92 = vunpack.c.0.s8 %v91
    %v93 = vlaneseq
    %v94 = vshrl.u32 %v93, 7
    %v95 = vsub.s32 %v92, %v94
    %v96 = vrot.slane %v80, %v95
    %v98 = vunpack.c.l.s4 1983009808
    %v99 = vunpack.c.0.s8 %v98
    %v100 = vlaneseq
    %v101 = vshrl.u32 %v100, 7
    %v102 = vsub.s32 %v99, %v101
    %v103 = vrot.slane %v81, %v102
    %v105 = vunpack.c.l.s4 1983009808
    %v106 = vunpack.c.0.s8 %v105
    %v107 = vlaneseq
    %v108 = vshrl.u32 %v107, 7
    %v109 = vsub.s32 %v106, %v108
    %v110 = vrot.slane %v82, %v109
    %v111 = vcombine.low %v89, %v103
    %v112 = vcombine.high %v89, %v103
    %v113 = vcombine.low %v96, %v110
    %v121 = vpack.c.bf16 %v75, %v75
    %v122 = vpack.c.bf16 %v76, %v76
    %v123 = vpack.c.bf16 %v77, %v77
    %v124 = vpack.c.bf16 %v78, %v78
    %v125 = vpack.c.bf16 %v111, %v111
    %v126 = vpack.c.bf16 %v112, %v112
    %v127 = vpack.c.bf16 %v113, %v113
    %v128 = vld [vmem:[%s1] sm:$0xf]
    %v129 = vld [vmem:[%s1 + $0x4] sm:$0xf]
    %v130 = vld [vmem:[%s1 + $0x8] sm:$0xf]
    %v131 = vld [vmem:[%s1 + $0xc] sm:$0xf]
    %v132 = vld [vmem:[%s1 + $0x10] sm:$0xf]
    %v133 = vld [vmem:[%s1 + $0x14] sm:$0xf]
    %v134 = vld [vmem:[%s1 + $0x18] sm:$0xf]
    %v135 = vld [vmem:[%s1 + $0x1c] sm:$0xf]
    %v136 = vld [vmem:[%s1 + $0x20] sm:$0xf]
    %v137 = vld [vmem:[%s1 + $0x24] sm:$0xf]
    %v138 = vld [vmem:[%s1 + $0x28] sm:$0xf]
    %v139 = vld [vmem:[%s1 + $0x2c] sm:$0xf]
    %v140 = vld [vmem:[%s1 + $0x30] sm:$0xf]
    %v141 = vld [vmem:[%s1 + $0x34] sm:$0xf]
    %v142 = vld [vmem:[%s1 + $0x38] sm:$0xf]
    %v143 = vld [vmem:[%s1 + $0x3c] sm:$0xf]
    %v144 = vld [vmem:[%s1 + $0x40] sm:$0xf]
    %v145 = vld [vmem:[%s1 + $0x44] sm:$0xf]
    %v146 = vld [vmem:[%s1 + $0x48] sm:$0xf]
    %v147 = vld [vmem:[%s1 + $0x4c] sm:$0xf]
    %v148 = vld [vmem:[%s1 + $0x50] sm:$0xf]
    %v149 = vld [vmem:[%s1 + $0x54] sm:$0xf]
    %v150 = vld [vmem:[%s1 + $0x58] sm:$0xf]
    %v151 = vld [vmem:[%s1 + $0x5c] sm:$0xf]
    %v152 = vld [vmem:[%s1 + $0x60] sm:$0xf]
    %v153 = vld [vmem:[%s1 + $0x64] sm:$0xf]
    %v154 = vld [vmem:[%s1 + $0x68] sm:$0xf]
    %v155 = vld [vmem:[%s1 + $0x6c] sm:$0xf]
    %v156 = vld [vmem:[%s1 + $0x70] sm:$0xf]
    %v157 = vld [vmem:[%s1 + $0x74] sm:$0xf]
    %v158 = vld [vmem:[%s1 + $0x78] sm:$0xf]
    %v159 = vld [vmem:[%s1 + $0x7c] sm:$0xf]
    %v160 = vld [vmem:[%s1 + $0x80] sm:$0xf]
    %v161 = vld [vmem:[%s1 + $0x84] sm:$0xf]
    %v162 = vld [vmem:[%s1 + $0x88] sm:$0xf]
    %v163 = vld [vmem:[%s1 + $0x8c] sm:$0xf]
    %v164 = vld [vmem:[%s1 + $0x90] sm:$0xf]
    %v165 = vld [vmem:[%s1 + $0x94] sm:$0xf]
    %v166 = vld [vmem:[%s1 + $0x98] sm:$0xf]
    %v167 = vld [vmem:[%s1 + $0x9c] sm:$0xf]
    %v168 = vld [vmem:[%s1 + $0xa0] sm:$0xf]
    %v169 = vld [vmem:[%s1 + $0xa4] sm:$0xf]
    %v170 = vld [vmem:[%s1 + $0xa8] sm:$0xf]
    %v171 = vld [vmem:[%s1 + $0xac] sm:$0xf]
    %v172 = vld [vmem:[%s1 + $0xb0] sm:$0xf]
    %v173 = vld [vmem:[%s1 + $0xb4] sm:$0xf]
    %v174 = vld [vmem:[%s1 + $0xb8] sm:$0xf]
    %v175 = vld [vmem:[%s1 + $0xbc] sm:$0xf]
    %v176 = vld [vmem:[%s1 + $0xc0] sm:$0xf]
    %v177 = vld [vmem:[%s1 + $0xc4] sm:$0xf]
    %v178 = vld [vmem:[%s1 + $0xc8] sm:$0xf]
    %v179 = vld [vmem:[%s1 + $0xcc] sm:$0xf]
    %v180 = vld [vmem:[%s1 + $0xd0] sm:$0xf]
    %v181 = vld [vmem:[%s1 + $0xd4] sm:$0xf]
    %v182 = vld [vmem:[%s1 + $0xd8] sm:$0xf]
    %v183 = vld [vmem:[%s1 + $0xdc] sm:$0xf]
    %v184 = vld [vmem:[%s1 + $0xe0] sm:$0xf]
    %v185 = vld [vmem:[%s1 + $0xe4] sm:$0xf]
    %v186 = vld [vmem:[%s1 + $0xe8] sm:$0xf]
    %v187 = vld [vmem:[%s1 + $0xec] sm:$0xf]
    %v188 = vld [vmem:[%s1 + $0xf0] sm:$0xf]
    %v189 = vld [vmem:[%s1 + $0xf4] sm:$0xf]
    %v190 = vld [vmem:[%s1 + $0xf8] sm:$0xf]
    %v191 = vld [vmem:[%s1 + $0xfc] sm:$0xf]
    %v192 = vld [vmem:[%s1 + $0x100] sm:$0xf]
    %v193 = vld [vmem:[%s1 + $0x104] sm:$0xf]
    %v194 = vld [vmem:[%s1 + $0x108] sm:$0xf]
    %v195 = vld [vmem:[%s1 + $0x10c] sm:$0xf]
    %v196 = vld [vmem:[%s1 + $0x110] sm:$0xf]
    %v197 = vld [vmem:[%s1 + $0x114] sm:$0xf]
    %v198 = vld [vmem:[%s1 + $0x118] sm:$0xf]
    %v199 = vld [vmem:[%s1 + $0x11c] sm:$0xf]
    %v200 = vld [vmem:[%s1 + $0x120] sm:$0xf]
    %v201 = vld [vmem:[%s1 + $0x124] sm:$0xf]
    %v202 = vld [vmem:[%s1 + $0x128] sm:$0xf]
    %v203 = vld [vmem:[%s1 + $0x12c] sm:$0xf]
    %v204 = vld [vmem:[%s1 + $0x130] sm:$0xf]
    %v205 = vld [vmem:[%s1 + $0x134] sm:$0xf]
    %v206 = vld [vmem:[%s1 + $0x138] sm:$0xf]
    %v207 = vld [vmem:[%s1 + $0x13c] sm:$0xf]
    %v208 = vld [vmem:[%s1 + $0x140] sm:$0xf]
    %v209 = vld [vmem:[%s1 + $0x144] sm:$0xf]
    %v210 = vld [vmem:[%s1 + $0x148] sm:$0xf]
    %v211 = vld [vmem:[%s1 + $0x14c] sm:$0xf]
    %v212 = vld [vmem:[%s1 + $0x150] sm:$0xf]
    %v213 = vld [vmem:[%s1 + $0x154] sm:$0xf]
    %v214 = vld [vmem:[%s1 + $0x158] sm:$0xf]
    %v215 = vld [vmem:[%s1 + $0x15c] sm:$0xf]
    %v216 = vld [vmem:[%s1 + $0x160] sm:$0xf]
    %v217 = vld [vmem:[%s1 + $0x164] sm:$0xf]
    %v218 = vld [vmem:[%s1 + $0x168] sm:$0xf]
    %v219 = vld [vmem:[%s1 + $0x16c] sm:$0xf]
    %v220 = vld [vmem:[%s1 + $0x170] sm:$0xf]
    %v221 = vld [vmem:[%s1 + $0x174] sm:$0xf]
    %v222 = vld [vmem:[%s1 + $0x178] sm:$0xf]
    %v223 = vld [vmem:[%s1 + $0x17c] sm:$0xf]
    %v224 = vld [vmem:[%s1 + $0x180] sm:$0xf]
    %v225 = vld [vmem:[%s1 + $0x184] sm:$0xf]
    %v226 = vld [vmem:[%s2] sm:$0x1]
    %v228 = vlaneseq
    %v229 = vshrl.u32 %v228, 7
    %v230 = vsub.s32 0, %v229
    %v231 = vrot.slane %v226, %v230
    %v331 = vunpack.c.l.b16 %v128
    %v332 = vunpack.c.l.b16 %v129
    %v333 = vunpack.c.l.b16 %v130
    %v334 = vunpack.c.l.b16 %v131
    %v335 = vunpack.c.l.b16 %v132
    %v336 = vunpack.c.l.b16 %v133
    %v337 = vunpack.c.l.b16 %v134
    %v338 = vunpack.c.l.b16 %v135
    %v339 = vunpack.c.l.b16 %v136
    %v340 = vunpack.c.l.b16 %v137
    %v341 = vunpack.c.l.b16 %v138
    %v342 = vunpack.c.l.b16 %v139
    %v343 = vunpack.c.l.b16 %v140
    %v344 = vunpack.c.l.b16 %v141
    %v345 = vunpack.c.l.b16 %v142
    %v346 = vunpack.c.l.b16 %v143
    %v347 = vunpack.c.l.b16 %v144
    %v348 = vunpack.c.l.b16 %v145
    %v349 = vunpack.c.l.b16 %v146
    %v350 = vunpack.c.l.b16 %v147
    %v351 = vunpack.c.l.b16 %v148
    %v352 = vunpack.c.l.b16 %v149
    %v353 = vunpack.c.l.b16 %v150
    %v354 = vunpack.c.l.b16 %v151
    %v355 = vunpack.c.l.b16 %v152
    %v356 = vunpack.c.l.b16 %v153
    %v357 = vunpack.c.l.b16 %v154
    %v358 = vunpack.c.l.b16 %v155
    %v359 = vunpack.c.l.b16 %v156
    %v360 = vunpack.c.l.b16 %v157
    %v361 = vunpack.c.l.b16 %v158
    %v362 = vunpack.c.l.b16 %v159
    %v363 = vunpack.c.l.b16 %v160
    %v364 = vunpack.c.l.b16 %v161
    %v365 = vunpack.c.l.b16 %v162
    %v366 = vunpack.c.l.b16 %v163
    %v367 = vunpack.c.l.b16 %v164
    %v368 = vunpack.c.l.b16 %v165
    %v369 = vunpack.c.l.b16 %v166
    %v370 = vunpack.c.l.b16 %v167
    %v371 = vunpack.c.l.b16 %v168
    %v372 = vunpack.c.l.b16 %v169
    %v373 = vunpack.c.l.b16 %v170
    %v374 = vunpack.c.l.b16 %v171
    %v375 = vunpack.c.l.b16 %v172
    %v376 = vunpack.c.l.b16 %v173
    %v377 = vunpack.c.l.b16 %v174
    %v378 = vunpack.c.l.b16 %v175
    %v379 = vunpack.c.l.b16 %v176
    %v380 = vunpack.c.l.b16 %v177
    %v381 = vunpack.c.l.b16 %v178
    %v382 = vunpack.c.l.b16 %v179
    %v383 = vunpack.c.l.b16 %v180
    %v384 = vunpack.c.l.b16 %v181
    %v385 = vunpack.c.l.b16 %v182
    %v386 = vunpack.c.l.b16 %v183
    %v387 = vunpack.c.l.b16 %v184
    %v388 = vunpack.c.l.b16 %v185
    %v389 = vunpack.c.l.b16 %v186
    %v390 = vunpack.c.l.b16 %v187
    %v391 = vunpack.c.l.b16 %v188
    %v392 = vunpack.c.l.b16 %v189
    %v393 = vunpack.c.l.b16 %v190
    %v394 = vunpack.c.l.b16 %v191
    %v395 = vunpack.c.l.b16 %v192
    %v396 = vunpack.c.l.b16 %v193
    %v397 = vunpack.c.l.b16 %v194
    %v398 = vunpack.c.l.b16 %v195
    %v399 = vunpack.c.l.b16 %v196
    %v400 = vunpack.c.l.b16 %v197
    %v401 = vunpack.c.l.b16 %v198
    %v402 = vunpack.c.l.b16 %v199
    %v403 = vunpack.c.l.b16 %v200
    %v404 = vunpack.c.l.b16 %v201
    %v405 = vunpack.c.l.b16 %v202
    %v406 = vunpack.c.l.b16 %v203
    %v407 = vunpack.c.l.b16 %v204
    %v408 = vunpack.c.l.b16 %v205
    %v409 = vunpack.c.l.b16 %v206
    %v410 = vunpack.c.l.b16 %v207
    %v411 = vunpack.c.l.b16 %v208
    %v412 = vunpack.c.l.b16 %v209
    %v413 = vunpack.c.l.b16 %v210
    %v414 = vunpack.c.l.b16 %v211
    %v415 = vunpack.c.l.b16 %v212
    %v416 = vunpack.c.l.b16 %v213
    %v417 = vunpack.c.l.b16 %v214
    %v418 = vunpack.c.l.b16 %v215
    %v419 = vunpack.c.l.b16 %v216
    %v420 = vunpack.c.l.b16 %v217
    %v421 = vunpack.c.l.b16 %v218
    %v422 = vunpack.c.l.b16 %v219
    %v423 = vunpack.c.l.b16 %v220
    %v424 = vunpack.c.l.b16 %v221
    %v425 = vunpack.c.l.b16 %v222
    %v426 = vunpack.c.l.b16 %v223
    %v427 = vunpack.c.l.b16 %v224
    %v428 = vunpack.c.l.b16 %v225
    %v429 = vpack.c.b16 %v332, %v331
    %v430 = vpack.c.b16 %v334, %v333
    %v431 = vpack.c.b16 %v336, %v335
    %v432 = vpack.c.b16 %v338, %v337
    %v433 = vpack.c.b16 %v340, %v339
    %v434 = vpack.c.b16 %v342, %v341
    %v435 = vpack.c.b16 %v344, %v343
    %v436 = vpack.c.b16 %v346, %v345
    %v437 = vpack.c.b16 %v348, %v347
    %v438 = vpack.c.b16 %v350, %v349
    %v439 = vpack.c.b16 %v352, %v351
    %v440 = vpack.c.b16 %v354, %v353
    %v441 = vpack.c.b16 %v356, %v355
    %v442 = vpack.c.b16 %v358, %v357
    %v443 = vpack.c.b16 %v360, %v359
    %v444 = vpack.c.b16 %v362, %v361
    %v445 = vpack.c.b16 %v364, %v363
    %v446 = vpack.c.b16 %v366, %v365
    %v447 = vpack.c.b16 %v368, %v367
    %v448 = vpack.c.b16 %v370, %v369
    %v449 = vpack.c.b16 %v372, %v371
    %v450 = vpack.c.b16 %v374, %v373
    %v451 = vpack.c.b16 %v376, %v375
    %v452 = vpack.c.b16 %v378, %v377
    %v453 = vpack.c.b16 %v380, %v379
    %v454 = vpack.c.b16 %v382, %v381
    %v455 = vpack.c.b16 %v384, %v383
    %v456 = vpack.c.b16 %v386, %v385
    %v457 = vpack.c.b16 %v388, %v387
    %v458 = vpack.c.b16 %v390, %v389
    %v459 = vpack.c.b16 %v392, %v391
    %v460 = vpack.c.b16 %v394, %v393
    %v461 = vpack.c.b16 %v396, %v395
    %v462 = vpack.c.b16 %v398, %v397
    %v463 = vpack.c.b16 %v400, %v399
    %v464 = vpack.c.b16 %v402, %v401
    %v465 = vpack.c.b16 %v404, %v403
    %v466 = vpack.c.b16 %v406, %v405
    %v467 = vpack.c.b16 %v408, %v407
    %v468 = vpack.c.b16 %v410, %v409
    %v469 = vpack.c.b16 %v412, %v411
    %v470 = vpack.c.b16 %v414, %v413
    %v471 = vpack.c.b16 %v416, %v415
    %v472 = vpack.c.b16 %v418, %v417
    %v473 = vpack.c.b16 %v420, %v419
    %v474 = vpack.c.b16 %v422, %v421
    %v475 = vpack.c.b16 %v424, %v423
    %v476 = vpack.c.b16 %v426, %v425
    %v477 = vpack.c.b16 %v428, %v427
    %vm527 = vcmask 130048
    %v529 = vsel %vm527, %v127, 0
    %531 = vmatprep.subr.bf16.mxu0 0
    %532 = vmatpush1.bf16.msra.mxu0 %v429
    %533 = vmatprep.subr.bf16.mxu0 0
    %534 = vmatpush1.bf16.msra.mxu0 %v430
    %535 = vmatprep.subr.bf16.mxu0 0
    %536 = vmatpush1.bf16.msra.mxu0 %v431
    %537 = vmatprep.subr.bf16.mxu0 0
    %538 = vmatpush1.bf16.msra.mxu0 %v432
    %539 = vmatprep.subr.bf16.mxu0 0
    %540 = vmatpush1.bf16.msra.mxu0 %v433
    %541 = vmatprep.subr.bf16.mxu0 0
    %542 = vmatpush1.bf16.msra.mxu0 %v434
    %543 = vmatprep.subr.bf16.mxu0 0
    %544 = vmatpush1.bf16.msra.mxu0 %v435
    %545 = vmatprep.subr.bf16.mxu0 0
    %546 = vmatpush1.bf16.msra.mxu0 %v436
    %547 = vmatprep.subr.bf16.mxu0 0
    %548 = vmatpush1.bf16.msra.mxu0 %v437
    %549 = vmatprep.subr.bf16.mxu0 0
    %550 = vmatpush1.bf16.msra.mxu0 %v438
    %551 = vmatprep.subr.bf16.mxu0 0
    %552 = vmatpush1.bf16.msra.mxu0 %v439
    %553 = vmatprep.subr.bf16.mxu0 0
    %554 = vmatpush1.bf16.msra.mxu0 %v440
    %555 = vmatprep.subr.bf16.mxu0 0
    %556 = vmatpush1.bf16.msra.mxu0 %v441
    %557 = vmatprep.subr.bf16.mxu0 0
    %558 = vmatpush1.bf16.msra.mxu0 %v442
    %559 = vmatprep.subr.bf16.mxu0 0
    %560 = vmatpush1.bf16.msra.mxu0 %v443
    %561 = vmatprep.subr.bf16.mxu0 0
    %562 = vmatpush1.bf16.msra.mxu0 %v444
    %563 = vmatprep.mubr.bf16.mxu0 %v122
    %564 = vmatmul.mubr.bf16.gmra.mrb[0].mxu0 %v121
    %v565 = vpop.f32.mrb[0].mxu0
    %v566 = vadd.f32 %v231, %v565
    %v567 = vpop.f32.mrb[0].mxu0
    %v568 = vpop.f32.mrb[0].mxu0
    %v569 = vpop.f32.mrb[0].mxu0
    %570 = vdwg.mxu0
    %571 = vmatprep.subr.bf16.mxu0 0
    %572 = vmatpush1.bf16.msra.mxu0 %v445
    %573 = vmatprep.subr.bf16.mxu0 0
    %574 = vmatpush1.bf16.msra.mxu0 %v446
    %575 = vmatprep.subr.bf16.mxu0 0
    %576 = vmatpush1.bf16.msra.mxu0 %v447
    %577 = vmatprep.subr.bf16.mxu0 0
    %578 = vmatpush1.bf16.msra.mxu0 %v448
    %579 = vmatprep.subr.bf16.mxu0 0
    %580 = vmatpush1.bf16.msra.mxu0 %v449
    %581 = vmatprep.subr.bf16.mxu0 0
    %582 = vmatpush1.bf16.msra.mxu0 %v450
    %583 = vmatprep.subr.bf16.mxu0 0
    %584 = vmatpush1.bf16.msra.mxu0 %v451
    %585 = vmatprep.subr.bf16.mxu0 0
    %586 = vmatpush1.bf16.msra.mxu0 %v452
    %587 = vmatprep.subr.bf16.mxu0 0
    %588 = vmatpush1.bf16.msra.mxu0 %v453
    %589 = vmatprep.subr.bf16.mxu0 0
    %590 = vmatpush1.bf16.msra.mxu0 %v454
    %591 = vmatprep.subr.bf16.mxu0 0
    %592 = vmatpush1.bf16.msra.mxu0 %v455
    %593 = vmatprep.subr.bf16.mxu0 0
    %594 = vmatpush1.bf16.msra.mxu0 %v456
    %595 = vmatprep.subr.bf16.mxu0 0
    %596 = vmatpush1.bf16.msra.mxu0 %v457
    %597 = vmatprep.subr.bf16.mxu0 0
    %598 = vmatpush1.bf16.msra.mxu0 %v458
    %599 = vmatprep.subr.bf16.mxu0 0
    %600 = vmatpush1.bf16.msra.mxu0 %v459
    %601 = vmatprep.subr.bf16.mxu0 0
    %602 = vmatpush1.bf16.msra.mxu0 %v460
    %603 = vmatprep.mubr.bf16.mxu0 %v124
    %604 = vmatmul.mubr.bf16.gmra.mrb[0].mxu0 %v123
    %v605 = vpop.f32.mrb[0].mxu0
    %v606 = vadd.f32 %v566, %v605
    %v607 = vpop.f32.mrb[0].mxu0
    %v608 = vpop.f32.mrb[0].mxu0
    %v609 = vpop.f32.mrb[0].mxu0
    %610 = vdwg.mxu0
    %611 = vmatprep.subr.bf16.mxu0 0
    %612 = vmatpush1.bf16.msra.mxu0 %v461
    %613 = vmatprep.subr.bf16.mxu0 0
    %614 = vmatpush1.bf16.msra.mxu0 %v462
    %615 = vmatprep.subr.bf16.mxu0 0
    %616 = vmatpush1.bf16.msra.mxu0 %v463
    %617 = vmatprep.subr.bf16.mxu0 0
    %618 = vmatpush1.bf16.msra.mxu0 %v464
    %619 = vmatprep.subr.bf16.mxu0 0
    %620 = vmatpush1.bf16.msra.mxu0 %v465
    %621 = vmatprep.subr.bf16.mxu0 0
    %622 = vmatpush1.bf16.msra.mxu0 %v466
    %623 = vmatprep.subr.bf16.mxu0 0
    %624 = vmatpush1.bf16.msra.mxu0 %v467
    %625 = vmatprep.subr.bf16.mxu0 0
    %626 = vmatpush1.bf16.msra.mxu0 %v468
    %627 = vmatprep.subr.bf16.mxu0 0
    %628 = vmatpush1.bf16.msra.mxu0 %v469
    %629 = vmatprep.subr.bf16.mxu0 0
    %630 = vmatpush1.bf16.msra.mxu0 %v470
    %631 = vmatprep.subr.bf16.mxu0 0
    %632 = vmatpush1.bf16.msra.mxu0 %v471
    %633 = vmatprep.subr.bf16.mxu0 0
    %634 = vmatpush1.bf16.msra.mxu0 %v472
    %635 = vmatprep.subr.bf16.mxu0 0
    %636 = vmatpush1.bf16.msra.mxu0 %v473
    %637 = vmatprep.subr.bf16.mxu0 0
    %638 = vmatpush1.bf16.msra.mxu0 %v474
    %639 = vmatprep.subr.bf16.mxu0 0
    %640 = vmatpush1.bf16.msra.mxu0 %v475
    %641 = vmatprep.subr.bf16.mxu0 0
    %642 = vmatpush1.bf16.msra.mxu0 %v476
    %643 = vmatprep.mubr.bf16.mxu0 %v126
    %644 = vmatmul.mubr.bf16.gmra.mrb[0].mxu0 %v125
    %v645 = vpop.f32.mrb[0].mxu0
    %v646 = vadd.f32 %v606, %v645
    %v647 = vpop.f32.mrb[0].mxu0
    %v648 = vpop.f32.mrb[0].mxu0
    %v649 = vpop.f32.mrb[0].mxu0
    %650 = vdwg.mxu0
    %651 = vmatprep.subr.bf16.mxu0 0
    %652 = vmatpush1.bf16.msra.mxu0 %v477
    %653 = vmatprep.subr.bf16.mxu0 0
    %654 = vmatpush1.bf16.msra.mxu0 0
    %655 = vmatprep.subr.bf16.mxu0 0
    %656 = vmatpush1.bf16.msra.mxu0 0
    %657 = vmatprep.subr.bf16.mxu0 0
    %658 = vmatpush1.bf16.msra.mxu0 0
    %659 = vmatprep.subr.bf16.mxu0 0
    %660 = vmatpush1.bf16.msra.mxu0 0
    %661 = vmatprep.subr.bf16.mxu0 0
    %662 = vmatpush1.bf16.msra.mxu0 0
    %663 = vmatprep.subr.bf16.mxu0 0
    %664 = vmatpush1.bf16.msra.mxu0 0
    %665 = vmatprep.subr.bf16.mxu0 0
    %666 = vmatpush1.bf16.msra.mxu0 0
    %667 = vmatprep.subr.bf16.mxu0 0
    %668 = vmatpush1.bf16.msra.mxu0 0
    %669 = vmatprep.subr.bf16.mxu0 0
    %670 = vmatpush1.bf16.msra.mxu0 0
    %671 = vmatprep.subr.bf16.mxu0 0
    %672 = vmatpush1.bf16.msra.mxu0 0
    %673 = vmatprep.subr.bf16.mxu0 0
    %674 = vmatpush1.bf16.msra.mxu0 0
    %675 = vmatprep.subr.bf16.mxu0 0
    %676 = vmatpush1.bf16.msra.mxu0 0
    %677 = vmatprep.subr.bf16.mxu0 0
    %678 = vmatpush1.bf16.msra.mxu0 0
    %679 = vmatprep.subr.bf16.mxu0 0
    %680 = vmatpush1.bf16.msra.mxu0 0
    %681 = vmatprep.subr.bf16.mxu0 0
    %682 = vmatpush1.bf16.msra.mxu0 0
    %683 = vmatprep.mubr.bf16.mxu0 0
    %684 = vmatmul.mubr.bf16.gmra.mrb[0].mxu0 %v529
    %v685 = vpop.f32.mrb[0].mxu0
    %v686 = vadd.f32 %v646, %v685
    %v687 = vpop.f32.mrb[0].mxu0
    %v688 = vpop.f32.mrb[0].mxu0
    %v689 = vpop.f32.mrb[0].mxu0
    %690 = vdwg.mxu0
    %v691 = vmax.f32 %v686, 0.0
    %v692 = vpack.c.bf16 %v691, %v691
    %v693 = vld [vmem:[%s3] sm:$0xf]
    %v694 = vld [vmem:[%s3 + $0x4] sm:$0xf]
    %v695 = vld [vmem:[%s3 + $0x8] sm:$0xf]
    %v696 = vld [vmem:[%s3 + $0xc] sm:$0xf]
    %v697 = vld [vmem:[%s3 + $0x10] sm:$0xf]
    %v698 = vld [vmem:[%s3 + $0x14] sm:$0xf]
    %v699 = vld [vmem:[%s3 + $0x18] sm:$0xf]
    %v700 = vld [vmem:[%s3 + $0x1c] sm:$0xf]
    %v701 = vld [vmem:[%s3 + $0x20] sm:$0xf]
    %v702 = vld [vmem:[%s3 + $0x24] sm:$0xf]
    %v703 = vld [vmem:[%s3 + $0x28] sm:$0xf]
    %v704 = vld [vmem:[%s3 + $0x2c] sm:$0xf]
    %v705 = vld [vmem:[%s3 + $0x30] sm:$0xf]
    %v706 = vld [vmem:[%s3 + $0x34] sm:$0xf]
    %v707 = vld [vmem:[%s3 + $0x38] sm:$0xf]
    %v708 = vld [vmem:[%s3 + $0x3c] sm:$0xf]
    %v709 = vld [vmem:[%s4] sm:$0x1]
    %v711 = vlaneseq
    %v712 = vshrl.u32 %v711, 7
    %v713 = vsub.s32 0, %v712
    %v714 = vrot.slane %v709, %v713
    %v732 = vunpack.c.l.b16 %v693
    %v733 = vunpack.c.l.b16 %v694
    %v734 = vunpack.c.l.b16 %v695
    %v735 = vunpack.c.l.b16 %v696
    %v736 = vunpack.c.l.b16 %v697
    %v737 = vunpack.c.l.b16 %v698
    %v738 = vunpack.c.l.b16 %v699
    %v739 = vunpack.c.l.b16 %v700
    %v740 = vunpack.c.l.b16 %v701
    %v741 = vunpack.c.l.b16 %v702
    %v742 = vunpack.c.l.b16 %v703
    %v743 = vunpack.c.l.b16 %v704
    %v744 = vunpack.c.l.b16 %v705
    %v745 = vunpack.c.l.b16 %v706
    %v746 = vunpack.c.l.b16 %v707
    %v747 = vunpack.c.l.b16 %v708
    %v748 = vpack.c.b16 %v733, %v732
    %v749 = vpack.c.b16 %v735, %v734
    %v750 = vpack.c.b16 %v737, %v736
    %v751 = vpack.c.b16 %v739, %v738
    %v752 = vpack.c.b16 %v741, %v740
    %v753 = vpack.c.b16 %v743, %v742
    %v754 = vpack.c.b16 %v745, %v744
    %v755 = vpack.c.b16 %v747, %v746
    %764 = vmatprep.subr.bf16.mxu0 0
    %765 = vmatpush1.bf16.msra.mxu0 %v748
    %766 = vmatprep.subr.bf16.mxu0 0
    %767 = vmatpush1.bf16.msra.mxu0 %v749
    %768 = vmatprep.subr.bf16.mxu0 0
    %769 = vmatpush1.bf16.msra.mxu0 %v750
    %770 = vmatprep.subr.bf16.mxu0 0
    %771 = vmatpush1.bf16.msra.mxu0 %v751
    %772 = vmatprep.subr.bf16.mxu0 0
    %773 = vmatpush1.bf16.msra.mxu0 %v752
    %774 = vmatprep.subr.bf16.mxu0 0
    %775 = vmatpush1.bf16.msra.mxu0 %v753
    %776 = vmatprep.subr.bf16.mxu0 0
    %777 = vmatpush1.bf16.msra.mxu0 %v754
    %778 = vmatprep.subr.bf16.mxu0 0
    %779 = vmatpush1.bf16.msra.mxu0 %v755
    %780 = vmatprep.subr.bf16.mxu0 0
    %781 = vmatpush1.bf16.msra.mxu0 0
    %782 = vmatprep.subr.bf16.mxu0 0
    %783 = vmatpush1.bf16.msra.mxu0 0
    %784 = vmatprep.subr.bf16.mxu0 0
    %785 = vmatpush1.bf16.msra.mxu0 0
    %786 = vmatprep.subr.bf16.mxu0 0
    %787 = vmatpush1.bf16.msra.mxu0 0
    %788 = vmatprep.subr.bf16.mxu0 0
    %789 = vmatpush1.bf16.msra.mxu0 0
    %790 = vmatprep.subr.bf16.mxu0 0
    %791 = vmatpush1.bf16.msra.mxu0 0
    %792 = vmatprep.subr.bf16.mxu0 0
    %793 = vmatpush1.bf16.msra.mxu0 0
    %794 = vmatprep.subr.bf16.mxu0 0
    %795 = vmatpush1.bf16.msra.mxu0 0
    %796 = vmatprep.mubr.bf16.mxu0 0
    %797 = vmatmul.mubr.bf16.gmra.mrb[0].mxu0 %v692
    %v798 = vpop.f32.mrb[0].mxu0
    %v799 = vadd.f32 %v714, %v798
    %v800 = vpop.f32.mrb[0].mxu0
    %v801 = vpop.f32.mrb[0].mxu0
    %v802 = vpop.f32.mrb[0].mxu0
    %803 = vdwg.mxu0
    %v804 = vmax.f32 %v799, 0.0
    %v805 = vpack.c.bf16 %v804, %v804
    %v806 = vld [vmem:[%s5] sm:$0xf]
    %v807 = vld [vmem:[%s5 + $0x4] sm:$0xf]
    %v808 = vld [vmem:[%s5 + $0x8] sm:$0xf]
    %v809 = vld [vmem:[%s5 + $0xc] sm:$0xf]
    %v810 = vld [vmem:[%s5 + $0x10] sm:$0xf]
    %v811 = vld [vmem:[%s5 + $0x14] sm:$0xf]
    %v812 = vld [vmem:[%s5 + $0x18] sm:$0xf]
    %v813 = vld [vmem:[%s5 + $0x1c] sm:$0xf]
    %v814 = vld [vmem:[%s5 + $0x20] sm:$0xf]
    %v815 = vld [vmem:[%s5 + $0x24] sm:$0xf]
    %v816 = vld [vmem:[%s5 + $0x28] sm:$0xf]
    %v817 = vld [vmem:[%s5 + $0x2c] sm:$0xf]
    %v818 = vld [vmem:[%s5 + $0x30] sm:$0xf]
    %v819 = vld [vmem:[%s5 + $0x34] sm:$0xf]
    %v820 = vld [vmem:[%s5 + $0x38] sm:$0xf]
    %v821 = vld [vmem:[%s5 + $0x3c] sm:$0xf]
    %v822 = vld [vmem:[%s6] sm:$0x1]
    %v824 = vlaneseq
    %v825 = vshrl.u32 %v824, 7
    %v826 = vsub.s32 0, %v825
    %v827 = vrot.slane %v822, %v826
    %v845 = vunpack.c.l.b16 %v806
    %v846 = vunpack.c.l.b16 %v807
    %v847 = vunpack.c.l.b16 %v808
    %v848 = vunpack.c.l.b16 %v809
    %v849 = vunpack.c.l.b16 %v810
    %v850 = vunpack.c.l.b16 %v811
    %v851 = vunpack.c.l.b16 %v812
    %v852 = vunpack.c.l.b16 %v813
    %v853 = vunpack.c.l.b16 %v814
    %v854 = vunpack.c.l.b16 %v815
    %v855 = vunpack.c.l.b16 %v816
    %v856 = vunpack.c.l.b16 %v817
    %v857 = vunpack.c.l.b16 %v818
    %v858 = vunpack.c.l.b16 %v819
    %v859 = vunpack.c.l.b16 %v820
    %v860 = vunpack.c.l.b16 %v821
    %v861 = vpack.c.b16 %v846, %v845
    %v862 = vpack.c.b16 %v848, %v847
    %v863 = vpack.c.b16 %v850, %v849
    %v864 = vpack.c.b16 %v852, %v851
    %v865 = vpack.c.b16 %v854, %v853
    %v866 = vpack.c.b16 %v856, %v855
    %v867 = vpack.c.b16 %v858, %v857
    %v868 = vpack.c.b16 %v860, %v859
    %877 = vmatprep.subr.bf16.mxu0 0
    %878 = vmatpush1.bf16.msra.mxu0 %v861
    %879 = vmatprep.subr.bf16.mxu0 0
    %880 = vmatpush1.bf16.msra.mxu0 %v862
    %881 = vmatprep.subr.bf16.mxu0 0
    %882 = vmatpush1.bf16.msra.mxu0 %v863
    %883 = vmatprep.subr.bf16.mxu0 0
    %884 = vmatpush1.bf16.msra.mxu0 %v864
    %885 = vmatprep.subr.bf16.mxu0 0
    %886 = vmatpush1.bf16.msra.mxu0 %v865
    %887 = vmatprep.subr.bf16.mxu0 0
    %888 = vmatpush1.bf16.msra.mxu0 %v866
    %889 = vmatprep.subr.bf16.mxu0 0
    %890 = vmatpush1.bf16.msra.mxu0 %v867
    %891 = vmatprep.subr.bf16.mxu0 0
    %892 = vmatpush1.bf16.msra.mxu0 %v868
    %893 = vmatprep.subr.bf16.mxu0 0
    %894 = vmatpush1.bf16.msra.mxu0 0
    %895 = vmatprep.subr.bf16.mxu0 0
    %896 = vmatpush1.bf16.msra.mxu0 0
    %897 = vmatprep.subr.bf16.mxu0 0
    %898 = vmatpush1.bf16.msra.mxu0 0
    %899 = vmatprep.subr.bf16.mxu0 0
    %900 = vmatpush1.bf16.msra.mxu0 0
    %901 = vmatprep.subr.bf16.mxu0 0
    %902 = vmatpush1.bf16.msra.mxu0 0
    %903 = vmatprep.subr.bf16.mxu0 0
    %904 = vmatpush1.bf16.msra.mxu0 0
    %905 = vmatprep.subr.bf16.mxu0 0
    %906 = vmatpush1.bf16.msra.mxu0 0
    %907 = vmatprep.subr.bf16.mxu0 0
    %908 = vmatpush1.bf16.msra.mxu0 0
    %909 = vmatprep.mubr.bf16.mxu0 0
    %910 = vmatmul.mubr.bf16.gmra.mrb[0].mxu0 %v805
    %v911 = vpop.f32.mrb[0].mxu0
    %v912 = vadd.f32 %v827, %v911
    %v913 = vpop.f32.mrb[0].mxu0
    %v914 = vpop.f32.mrb[0].mxu0
    %v915 = vpop.f32.mrb[0].mxu0
    %916 = vdwg.mxu0
    %917 = vmax.xlane.f32.xlu0 %v912
    %v918 = vpop.xlane.xlu0 %917
    %v919 = vsub.f32 %v912, %v918
    %v920 = vmul.f32 %v919, 1.442695
    %v921 = vpow.pop %v920
    %922 = vadd.xlane.f32.xlu0 %v921
    %v923 = vpop.xlane.xlu0 %922
    %v924 = vlog2.pop %v923
    %v925 = vmul.f32 %v924, 0.6931472
    %v926 = vsub.f32 %v919, %v925
    %v927 = vpack.c.bf16 %v926, %v926
    %v930 = vunpack.c.l.s4 1966171168
    %v931 = vunpack.c.0.s8 %v930
    %v932 = vlaneseq
    %v933 = vshrl.u32 %v932, 7
    %v934 = vsub.s32 %v931, %v933
    %v935 = vrot.slane %v927, %v934
    %v936 = vcombine.high %v935, %v935
    %v938 = vunpack.c.l.s4 1966171168
    %v939 = vunpack.c.0.s8 %v938
    %v940 = vlaneseq
    %v941 = vshrl.u32 %v940, 7
    %v942 = vsub.s32 %v939, %v941
    %v943 = vrot.slane %v935, %v942
    %v945 = vunpack.c.l.s4 1966171168
    %v946 = vunpack.c.0.s8 %v945
    %v947 = vlaneseq
    %v948 = vshrl.u32 %v947, 7
    %v949 = vsub.s32 %v946, %v948
    %v950 = vrot.slane %v936, %v949
    %v951 = vcombine.high %v943, %v943
    %v952 = vcombine.high %v950, %v950
    %957 = vst [vmem:[#allocation2] sm:$0x1] %v943
    %958 = vst [vmem:[#allocation2 + $0x1] sm:$0x1] %v950
    %959 = vst [vmem:[#allocation2 + $0x2] sm:$0x1] %v951
    %960 = vst [vmem:[#allocation2 + $0x3] sm:$0x1] %v952
    // Predicated region
    $region30: #{logistic_regration_forward.1} parent=1 // pred_check
      _
    $region31: #{logistic_regration_forward.1} parent=1 // pred_check_branch
      %962 = sbr.rel (0) target = $region33
    $region32: #{logistic_regration_forward.1} parent=1 // pred_region
      // Predicated region
      $region34: #{logistic_regration_forward.1} parent=32 // pred_check
        _
      $region35: #{logistic_regration_forward.1} parent=32 // pred_check_branch
        %964 = sbr.rel (0) target = $region37
      $region36: #{logistic_regration_forward.1} parent=32 // pred_region
        // Predicated region
        $region38: #{logistic_regration_forward.1} parent=36 // pred_check
          _
        $region39: #{logistic_regration_forward.1} parent=36 // pred_check_branch
          %966 = sbr.rel target = $region41
        $region40: #{logistic_regration_forward.1} parent=36 // pred_region
          // Predicated region
          $region53: #{logistic_regration_forward.1} parent=40 // pred_check
            _
          $region54: #{logistic_regration_forward.1} parent=40 // pred_check_branch
            %981 = sbr.rel (0) target = $region56
          $region55: #{logistic_regration_forward.1} parent=40 // pred_region
            loop: start=0, step=1, limit=1
            $region57: #{logistic_regration_forward.1} parent=55 // loop_pre_header
              _
            $region58: #{logistic_regration_forward.1} parent=55 // loop_header
              %s984 = sphi 0, %s988
              %p985 = scmp.ge.s32.totalorder %s984, 1
              %s989 = sphi [#allocation2], [#allocation2]
              %s990 = sphi %s7, %s7
            $region59: #{logistic_regration_forward.1} parent=55 // loop_header_branch
              %987 = sbr.rel (%p985) target = $region63
            $region60: #{logistic_regration_forward.1} parent=55 // loop_body
              %v991 = vld [vmem:[%s989] sm:$0x1]
              %992 = vst [vmem:[%s990] sm:$0x1] %v991
            $region61: #{logistic_regration_forward.1} parent=55 // loop_footer
              %s988 = sadd.s32 1, %s984
            $region62: #{logistic_regration_forward.1} parent=55 // loop_footer_branch
              %983 = sbr.rel target = $region58
            $region63: #{logistic_regration_forward.1} parent=55 // loop_exit
              _
          $region56: #{logistic_regration_forward.1} parent=40 // pred_fallthru
            _
        $region41: #{logistic_regration_forward.1} parent=36 // pred_fallthru
          _
        // Predicated region
        $region42: #{logistic_regration_forward.1} parent=36 // pred_check
          _
        $region43: #{logistic_regration_forward.1} parent=36 // pred_check_branch
          %968 = sbr.rel (0) target = $region45
        $region44: #{logistic_regration_forward.1} parent=36 // pred_region
          loop: start=0, step=1, limit=1
          $region46: #{logistic_regration_forward.1} parent=44 // loop_pre_header
            _
          $region47: #{logistic_regration_forward.1} parent=44 // loop_header
            %s971 = sphi 0, %s975
            %p972 = scmp.ge.s32.totalorder %s971, 1
            %s976 = sphi [#allocation2], [#allocation2]
            %s977 = sphi %s7, %s7
          $region48: #{logistic_regration_forward.1} parent=44 // loop_header_branch
            %974 = sbr.rel (%p972) target = $region52
          $region49: #{logistic_regration_forward.1} parent=44 // loop_body
            %v978 = vld [vmem:[%s976] sm:$0x1]
            %979 = vst [vmem:[%s977] sm:$0x1] %v978
          $region50: #{logistic_regration_forward.1} parent=44 // loop_footer
            %s975 = sadd.s32 1, %s971
          $region51: #{logistic_regration_forward.1} parent=44 // loop_footer_branch
            %970 = sbr.rel target = $region47
          $region52: #{logistic_regration_forward.1} parent=44 // loop_exit
            _
        $region45: #{logistic_regration_forward.1} parent=36 // pred_fallthru
          _
      $region37: #{logistic_regration_forward.1} parent=32 // pred_fallthru
        _
      %993 = vnop
    $region33: #{logistic_regration_forward.1} parent=1 // pred_fallthru
      _
    // Predicated region
    $region64: #{logistic_regration_forward.1} parent=1 // pred_check
      _
    $region65: #{logistic_regration_forward.1} parent=1 // pred_check_branch
      %995 = sbr.rel (0) target = $region67
    $region66: #{logistic_regration_forward.1} parent=1 // pred_region
      _
    $region67: #{logistic_regration_forward.1} parent=1 // pred_fallthru
      _

</llo_original>
